<compile_context>
chip_gen: v7x
topology: tpu7x:2x2x1
jax: 0.10.0
libtpu: 0.0.40
codegen_flags: <defaults>
</compile_context>

<pallas_src>
import math
from functools import partial, lru_cache

import jax
import jax.numpy as jnp
from jax.experimental import pallas as pl
from jax.experimental.pallas import tpu as pltpu

CHANNEL = 32                      # RFB / aggregation channel, as in ResNetCPD(channel=32)
_VMEM_LIMIT = 48 * 1024 * 1024    # <= v7x 64 MiB physical; generous on v5e/v6e


# ----------------------------------------------------------------------------
# Tile selection
# ----------------------------------------------------------------------------
def _round_up(x, m):
    return (x + m - 1) // m * m


def _choose_m_tile(M):
    if M <= 512:
        t = _round_up(M, 16)          # full-M block, sublane aligned
        return t, t
    best_t, best_p = 512, _round_up(M, 512)
    for t in (256, 128):
        p = _round_up(M, t)
        if p < best_p:
            best_t, best_p = t, p
    return best_t, best_p


def _choose_n_tile(N):
    if N <= 512:
        return N, N                   # full-N block: no lane padding, no out slice
    best_t, best_p = 512, _round_up(N, 512)
    for t in (256, 128):
        p = _round_up(N, t)
        if p < best_p:
            best_t, best_p = t, p
    return best_t, best_p


def _choose_k_tile(K):
    if K <= 1024:
        return K, K                   # single K step -> accumulator-free kernel
    Kp = _round_up(K, 128)
    nb = Kp // 128
    for d in range(min(8, nb), 0, -1):
        if nb % d == 0:
            return d * 128, Kp
    return 128, Kp


# ----------------------------------------------------------------------------
# Pallas kernels: tiled matmul with fused per-channel scale/bias (+ReLU)
# ----------------------------------------------------------------------------
def _mm_single_kernel(x_ref, w_ref, s_ref, b_ref, o_ref, *, apply_relu):
    # Whole K fits in one block: no accumulator scratch, no zero-init.
    y = jnp.dot(x_ref[...], w_ref[...], preferred_element_type=jnp.float32)
    y = y * s_ref[...] + b_ref[...]
    if apply_relu:
        y = jnp.maximum(y, 0.0)
    o_ref[...] = y.astype(o_ref.dtype)


def _mm_acc_kernel(x_ref, w_ref, s_ref, b_ref, o_ref, acc_ref, *, apply_relu):
    k = pl.program_id(2)

    @pl.when(k == 0)
    def _():
        acc_ref[...] = jnp.zeros_like(acc_ref)

    acc_ref[...] += jnp.dot(x_ref[...], w_ref[...],
                            preferred_element_type=jnp.float32)

    @pl.when(k == pl.num_programs(2) - 1)
    def _():
        y = acc_ref[...] * s_ref[...] + b_ref[...]
        if apply_relu:
            y = jnp.maximum(y, 0.0)
        o_ref[...] = y.astype(o_ref.dtype)


@lru_cache(maxsize=None)
def _get_matmul_fn(Mp, Kp, Np, TM, TK, TN, apply_relu):
    k_steps = Kp // TK
    if k_steps == 1:
        fn = pl.pallas_call(
            partial(_mm_single_kernel, apply_relu=apply_relu),
            out_shape=jax.ShapeDtypeStruct((Mp, Np), jnp.float32),
            grid_spec=pltpu.PrefetchScalarGridSpec(
                num_scalar_prefetch=0,
                grid=(Mp // TM, Np // TN),
                in_specs=[
                    pl.BlockSpec((TM, TK), lambda i, j: (i, 0)),
                    pl.BlockSpec((TK, TN), lambda i, j: (0, j)),
                    pl.BlockSpec((1, TN), lambda i, j: (0, j)),
                    pl.BlockSpec((1, TN), lambda i, j: (0, j)),
                ],
                out_specs=pl.BlockSpec((TM, TN), lambda i, j: (i, j)),
            ),
            compiler_params=pltpu.CompilerParams(
                dimension_semantics=("parallel", "parallel"),
                vmem_limit_bytes=_VMEM_LIMIT),
        )
    else:
        fn = pl.pallas_call(
            partial(_mm_acc_kernel, apply_relu=apply_relu),
            out_shape=jax.ShapeDtypeStruct((Mp, Np), jnp.float32),
            grid_spec=pltpu.PrefetchScalarGridSpec(
                num_scalar_prefetch=0,
                grid=(Mp // TM, Np // TN, k_steps),
                in_specs=[
                    pl.BlockSpec((TM, TK), lambda i, j, k: (i, k)),
                    pl.BlockSpec((TK, TN), lambda i, j, k: (k, j)),
                    pl.BlockSpec((1, TN), lambda i, j, k: (0, j)),
                    pl.BlockSpec((1, TN), lambda i, j, k: (0, j)),
                ],
                out_specs=pl.BlockSpec((TM, TN), lambda i, j, k: (i, j)),
                scratch_shapes=[pltpu.VMEM((TM, TN), jnp.float32)],
            ),
            compiler_params=pltpu.CompilerParams(
                dimension_semantics=("parallel", "parallel", "arbitrary"),
                vmem_limit_bytes=_VMEM_LIMIT),
        )
    return jax.jit(fn)


def fused_matmul(a, w, scale, bias, relu):
    """a: (M, K) any float, w: (K, N) bf16, scale/bias: (N,) f32. Returns (M, N) f32."""
    M, K = a.shape
    Kw, N = w.shape
    assert Kw == K
    TM, Mp = _choose_m_tile(M)
    TK, Kp = _choose_k_tile(K)
    TN, Np = _choose_n_tile(N)

    # Make sure at least one parallel grid axis has extent >= 2 (v7x megacore).
    if Mp // TM == 1 and Np // TN == 1:
        if Mp >= 256 and (Mp // 2) % 8 == 0:
            TM = Mp // 2
        elif Np >= 256 and (Np // 2) % 128 == 0:
            TN = Np // 2

    a = a.astype(jnp.bfloat16)
    w = w.astype(jnp.bfloat16)
    if Mp != M or Kp != K:
        a = jnp.pad(a, ((0, Mp - M), (0, Kp - K)))
    if Kp != K or Np != N:
        w = jnp.pad(w, ((0, Kp - K), (0, Np - N)))
    s = scale.reshape(1, N).astype(jnp.float32)
    b = bias.reshape(1, N).astype(jnp.float32)
    if Np != N:
        s = jnp.pad(s, ((0, 0), (0, Np - N)))
        b = jnp.pad(b, ((0, 0), (0, Np - N)))

    fn = _get_matmul_fn(Mp, Kp, Np, TM, TK, TN, bool(relu))
    out = fn(a, w, s, b)
    if Mp != M:
        out = out[:M]
    if Np != N:
        out = out[:, :N]
    return out


# ----------------------------------------------------------------------------
# Conv2d + BatchNorm2d (+ ReLU) via (optional) im2col + Pallas matmul
# ----------------------------------------------------------------------------
def conv2d_bn(x, p, relu=False):
    """x: NHWC. p holds pre-reshaped bf16 weights + folded BN scale/bias."""
    kh, kw, cin, cout = p["kshape"]
    sh, sw = p["stride"]
    ph, pw = p["padding"]
    dh, dw = p["dilation"]
    N, H, W, C = x.shape
    Ho = (H + 2 * ph - dh * (kh - 1) - 1) // sh + 1
    Wo = (W + 2 * pw - dw * (kw - 1) - 1) // sw + 1

    if kh == 1 and kw == 1 and sh == 1 and sw == 1 and ph == 0 and pw == 0:
        patches = x.reshape(N * H * W, C)                 # 1x1 conv fast path
    else:
        xp = jnp.pad(x, ((0, 0), (ph, ph), (pw, pw), (0, 0)))
        cols = []
        for i in range(kh):
            for j in range(kw):
                cols.append(xp[:, i * dh: i * dh + (Ho - 1) * sh + 1: sh,
                               j * dw: j * dw + (Wo - 1) * sw + 1: sw, :])
        patches = jnp.concatenate(cols, axis=-1).reshape(N * Ho * Wo, kh * kw * C)

    out = fused_matmul(patches, p["w2d"], p["scale"], p["bias"], relu)
    return out.reshape(N, Ho, Wo, cout)


def basic_conv(p, x, relu=False):
    return conv2d_bn(x, p, relu=relu)


# ----------------------------------------------------------------------------
# Deterministic parameter construction
# ----------------------------------------------------------------------------
class PRNG:
    def __init__(self, seed):
        self.key = jax.random.PRNGKey(seed)

    def next(self):
        self.key, k = jax.random.split(self.key)
        return k


def _pair(v):
    return (v, v) if isinstance(v, int) else tuple(v)


def make_basic_conv(pg, cin, cout, kernel_size, stride=1, padding=0, dilation=1):
    kh, kw = _pair(kernel_size)
    fan_in = cin * kh * kw
    w = jax.random.normal(pg.next(), (kh, kw, cin, cout), jnp.float32) / math.sqrt(fan_in)
    conv_b = 0.01 * jax.random.normal(pg.next(), (cout,), jnp.float32)
    gamma = 1.0 + 0.1 * jax.random.normal(pg.next(), (cout,), jnp.float32)
    beta = 0.1 * jax.random.normal(pg.next(), (cout,), jnp.float32)
    mean = jnp.zeros((cout,), jnp.float32)
    var = jnp.ones((cout,), jnp.float32)
    eps = 1e-5
    scale = gamma / jnp.sqrt(var + eps)
    bias = beta + scale * (conv_b - mean)
    return dict(w2d=w.reshape(kh * kw * cin, cout).astype(jnp.bfloat16),
                scale=scale, bias=bias,
                kshape=(kh, kw, cin, cout),
                stride=_pair(stride), padding=_pair(padding), dilation=_pair(dilation))


def make_plain_conv(pg, cin, cout, kernel_size):
    kh, kw = _pair(kernel_size)
    fan_in = cin * kh * kw
    w = jax.random.normal(pg.next(), (kh, kw, cin, cout), jnp.float32) / math.sqrt(fan_in)
    conv_b = 0.01 * jax.random.normal(pg.next(), (cout,), jnp.float32)
    return dict(w2d=w.reshape(kh * kw * cin, cout).astype(jnp.bfloat16),
                scale=jnp.ones((cout,), jnp.float32), bias=conv_b,
                kshape=(kh, kw, cin, cout),
                stride=(1, 1), padding=(0, 0), dilation=(1, 1))


def _fuse_convs_along_cout(ps):
    """Fuse convs sharing input / kernel geometry into one matmul (concat Cout)."""
    kh, kw, cin, _ = ps[0]["kshape"]
    w2d = jnp.concatenate([p["w2d"] for p in ps], axis=1)
    scale = jnp.concatenate([p["scale"] for p in ps])
    bias = jnp.concatenate([p["bias"] for p in ps])
    return dict(w2d=w2d, scale=scale, bias=bias,
                kshape=(kh, kw, cin, int(w2d.shape[1])),
                stride=ps[0]["stride"], padding=ps[0]["padding"],
                dilation=ps[0]["dilation"])


def make_rfb(pg, in_channel, c):
    # The five 1x1 heads (branch0, branch1[0], branch2[0], branch3[0], conv_res)
    # all read the same input -> fuse into one lane-dense N = 5*c matmul.
    heads = [make_basic_conv(pg, in_channel, c, 1) for _ in range(5)]
    return dict(
        channel=c,
        head=_fuse_convs_along_cout(heads),
        b1=[make_basic_conv(pg, c, c, (1, 3), padding=(0, 1)),
            make_basic_conv(pg, c, c, (3, 1), padding=(1, 0)),
            make_basic_conv(pg, c, c, 3, padding=3, dilation=3)],
        b2=[make_basic_conv(pg, c, c, (1, 5), padding=(0, 2)),
            make_basic_conv(pg, c, c, (5, 1), padding=(2, 0)),
            make_basic_conv(pg, c, c, 3, padding=5, dilation=5)],
        b3=[make_basic_conv(pg, c, c, (1, 7), padding=(0, 3)),
            make_basic_conv(pg, c, c, (7, 1), padding=(3, 0)),
            make_basic_conv(pg, c, c, 3, padding=7, dilation=7)],
        conv_cat=make_basic_conv(pg, 4 * c, c, 3, padding=1),
    )


def make_agg(pg, c):
    return dict(
        cu1=make_basic_conv(pg, c, c, 3, padding=1),
        cu2=make_basic_conv(pg, c, c, 3, padding=1),
        cu3=make_basic_conv(pg, c, c, 3, padding=1),
        cu4=make_basic_conv(pg, c, c, 3, padding=1),
        cu5=make_basic_conv(pg, 2 * c, 2 * c, 3, padding=1),
        cc2=make_basic_conv(pg, 2 * c, 2 * c, 3, padding=1),
        cc3=make_basic_conv(pg, 3 * c, 3 * c, 3, padding=1),
        conv4=make_basic_conv(pg, 3 * c, 3 * c, 3, padding=1),
        conv5=make_plain_conv(pg, 3 * c, 1, 1),
    )


def make_backbone(pg):
    # TODO(synk): res2net50_v1b_26w_4s bottleneck stacks are not provided in the
    # reference; each stage is stood in by a single BasicConv2d+ReLU with the
    # correct in/out channels and stride so downstream shapes match.
    return dict(
        conv1=make_basic_conv(pg, 3, 64, 7, stride=2, padding=3),
        layer1=make_basic_conv(pg, 64, 256, 3, stride=1, padding=1),
        layer2=make_basic_conv(pg, 256, 512, 3, stride=2, padding=1),
        layer3=make_basic_conv(pg, 512, 1024, 1, stride=2),
        layer4=make_basic_conv(pg, 1024, 2048, 1, stride=2),
    )


# ----------------------------------------------------------------------------
# JAX glue: maxpool, bilinear upsampling
# ----------------------------------------------------------------------------
def maxpool3x3s2(x):  # NHWC, kernel 3, stride 2, pad 1 (as resnet.maxpool)
    return jax.lax.reduce_window(
        x, -jnp.inf, jax.lax.max,
        window_dimensions=(1, 3, 3, 1), window_strides=(1, 2, 2, 1),
        padding=((0, 0), (1, 1), (1, 1), (0, 0)))


def upsample_bilinear(x, scale, align_corners):
    N, H, W, C = x.shape
    Ho, Wo = H * scale, W * scale

    def coords(L, Lo):
        if align_corners:
            if Lo == 1:
                return jnp.zeros((1,), jnp.float32)
            return jnp.arange(Lo, dtype=jnp.float32) * ((L - 1) / (Lo - 1))
        c = (jnp.arange(Lo, dtype=jnp.float32) + 0.5) / scale - 0.5
        return jnp.clip(c, 0.0, L - 1)

    ys, xs = coords(H, Ho), coords(W, Wo)
    y0 = jnp.floor(ys).astype(jnp.int32)
    y1 = jnp.minimum(y0 + 1, H - 1)
    wy = (ys - y0)[None, :, None, None]
    x0 = jnp.floor(xs).astype(jnp.int32)
    x1 = jnp.minimum(x0 + 1, W - 1)
    wx = (xs - x0)[None, None, :, None]
    top = x[:, y0, :, :] * (1.0 - wy) + x[:, y1, :, :] * wy
    out = top[:, :, x0, :] * (1.0 - wx) + top[:, :, x1, :] * wx
    return out


# ----------------------------------------------------------------------------
# Module forwards
# ----------------------------------------------------------------------------
def rfb_forward(p, x):
    c = p["channel"]
    h = basic_conv(p["head"], x)          # fused: [b0 | b1_in | b2_in | b3_in | res]
    x0 = h[..., 0 * c:1 * c]
    x1 = h[..., 1 * c:2 * c]
    x2 = h[..., 2 * c:3 * c]
    x3 = h[..., 3 * c:4 * c]
    res = h[..., 4 * c:5 * c]
    for l in p["b1"]:
        x1 = basic_conv(l, x1)
    for l in p["b2"]:
        x2 = basic_conv(l, x2)
    for l in p["b3"]:
        x3 = basic_conv(l, x3)
    x_cat = basic_conv(p["conv_cat"], jnp.concatenate([x0, x1, x2, x3], axis=-1))
    return jnp.maximum(x_cat + res, 0.0)


def agg_forward(p, x1, x2, x3):
    up = lambda t: upsample_bilinear(t, 2, align_corners=True)
    x1_1 = x1
    x2_1 = basic_conv(p["cu1"], up(x1)) * x2
    x3_1 = basic_conv(p["cu2"], up(up(x1))) * basic_conv(p["cu3"], up(x2)) * x3
    x2_2 = jnp.concatenate([x2_1, basic_conv(p["cu4"], up(x1_1))], axis=-1)
    x2_2 = basic_conv(p["cc2"], x2_2)
    x3_2 = jnp.concatenate([x3_1, basic_conv(p["cu5"], up(x2_2))], axis=-1)
    x3_2 = basic_conv(p["cc3"], x3_2)
    x = basic_conv(p["conv4"], x3_2)
    x = basic_conv(p["conv5"], x)         # plain 1x1 conv (scale=1, bias=conv bias)
    return x


def resnet_cpd_forward(params, x_nchw):
    x = jnp.transpose(x_nchw, (0, 2, 3, 1))  # NCHW -> NHWC
    bb = params["backbone"]

    x = basic_conv(bb["conv1"], x, relu=True)     # conv1 + bn1 + relu
    x = maxpool3x3s2(x)
    x1 = basic_conv(bb["layer1"], x, relu=True)
    x2 = basic_conv(bb["layer2"], x1, relu=True)
    x3 = basic_conv(bb["layer3"], x2, relu=True)
    x4 = basic_conv(bb["layer4"], x3, relu=True)

    x2_1 = rfb_forward(params["rfb2"], x2)
    x3_1 = rfb_forward(params["rfb3"], x3)
    x4_1 = rfb_forward(params["rfb4"], x4)
    attention = agg_forward(params["agg"], x4_1, x3_1, x2_1)

    # TODO(synk): HA (holistic attention) module definition not provided in the
    # reference; stood in by channel-broadcast gating x2 * sigmoid(attention).
    x2_2 = x2 * jax.nn.sigmoid(attention)

    x3_2 = basic_conv(bb["layer3"], x2_2, relu=True)   # shared layer3 weights
    x4_2 = basic_conv(bb["layer4"], x3_2, relu=True)   # shared layer4 weights
    x2_2r = rfb_forward(params["rfb2"], x2_2)
    x3_2r = rfb_forward(params["rfb3"], x3_2)
    x4_2r = rfb_forward(params["rfb4"], x4_2)
    detection = agg_forward(params["agg"], x4_2r, x3_2r, x2_2r)

    attention_map = upsample_bilinear(attention, 8, align_corners=False)
    detection_map = upsample_bilinear(detection, 8, align_corners=False)
    return (jnp.transpose(attention_map, (0, 3, 1, 2)),
            jnp.transpose(detection_map, (0, 3, 1, 2)))


# ----------------------------------------------------------------------------
if __name__ == "__main__":
    pg = PRNG(1234)
    params = dict(
        backbone=make_backbone(pg),
        rfb2=make_rfb(pg, 512, CHANNEL),
        rfb3=make_rfb(pg, 1024, CHANNEL),
        rfb4=make_rfb(pg, 2048, CHANNEL),
        agg=make_agg(pg, CHANNEL),
    )

    x = jax.random.normal(jax.random.PRNGKey(0), (2, 3, 64, 64), jnp.float32)
    attention_map, detection_map = resnet_cpd_forward(params, x)
    jax.block_until_ready((attention_map, detection_map))

    assert attention_map.shape == (2, 1, 64, 64), attention_map.shape
    assert detection_map.shape == (2, 1, 64, 64), detection_map.shape
    assert jnp.all(jnp.isfinite(attention_map)) and jnp.all(jnp.isfinite(detection_map))
    print("KERNEL_OK")
</pallas_src>

<mosaic_0001>
module attributes {stable_mosaic.version = 11 : i64} {
  func.func @_mm_single_kernel(%arg0: i32, %arg1: i32, %arg2: memref<512x147xbf16, #tpu.memory_space<vmem>>, %arg3: memref<147x64xbf16, #tpu.memory_space<vmem>>, %arg4: memref<1x64xf32, #tpu.memory_space<vmem>>, %arg5: memref<1x64xf32, #tpu.memory_space<vmem>>, %arg6: memref<512x64xf32, #tpu.memory_space<vmem>>) attributes {dimension_semantics = [#tpu.dimension_semantics<parallel>, #tpu.dimension_semantics<parallel>], iteration_bounds = array<i64: 4, 1>, scalar_prefetch = 0 : i64, scratch_operands = 0 : i64, tpu.core_type = #tpu.core_type<tc>, window_params = [{transform_indices = @transform_0, window_bounds = array<i64: 512, 147>}, {transform_indices = @transform_1, window_bounds = array<i64: 147, 64>}, {transform_indices = @transform_2, window_bounds = array<i64: 1, 64>}, {transform_indices = @transform_3, window_bounds = array<i64: 1, 64>}, {transform_indices = @transform_4, window_bounds = array<i64: 512, 64>}]} {
    %c0 = arith.constant 0 : index
    %c0_0 = arith.constant 0 : index
    %0 = vector.load %arg2[%c0, %c0_0] : memref<512x147xbf16, #tpu.memory_space<vmem>>, vector<512x147xbf16>
    %c0_1 = arith.constant 0 : index
    %c0_2 = arith.constant 0 : index
    %1 = vector.load %arg3[%c0_1, %c0_2] : memref<147x64xbf16, #tpu.memory_space<vmem>>, vector<147x64xbf16>
    %cst = arith.constant dense<0.000000e+00> : vector<512x64xf32>
    %2 = tpu.matmul %0, %1, %cst {dimension_numbers = #tpu.dot_dimension_numbers<[1], [0], [0], [1], [0, 0, 1, 1], [], []>} : vector<512x147xbf16>, vector<147x64xbf16>, vector<512x64xf32> -> vector<512x64xf32>
    %c0_3 = arith.constant 0 : index
    %c0_4 = arith.constant 0 : index
    %3 = vector.load %arg4[%c0_3, %c0_4] : memref<1x64xf32, #tpu.memory_space<vmem>>, vector<1x64xf32>
    %4 = vector.broadcast %3 : vector<1x64xf32> to vector<512x64xf32>
    %5 = arith.mulf %2, %4 : vector<512x64xf32>
    %c0_5 = arith.constant 0 : index
    %c0_6 = arith.constant 0 : index
    %6 = vector.load %arg5[%c0_5, %c0_6] : memref<1x64xf32, #tpu.memory_space<vmem>>, vector<1x64xf32>
    %7 = vector.broadcast %6 : vector<1x64xf32> to vector<512x64xf32>
    %8 = arith.addf %5, %7 : vector<512x64xf32>
    %cst_7 = arith.constant 0.000000e+00 : f32
    %9 = vector.broadcast %cst_7 : f32 to vector<512x64xf32>
    %10 = arith.maximumf %8, %9 : vector<512x64xf32>
    %c0_8 = arith.constant 0 : index
    %c0_9 = arith.constant 0 : index
    %11 = vector.load %arg6[%c0_8, %c0_9] : memref<512x64xf32, #tpu.memory_space<vmem>>, vector<512x64xf32>
    tpu.vector_store %arg6[%c0_8, %c0_9], %10 {strides = array<i32>} : memref<512x64xf32, #tpu.memory_space<vmem>>, vector<512x64xf32>,
    return
  }
  func.func @transform_0(%arg0: i32, %arg1: i32) -> (i32, i32) {
    %c0_i32 = arith.constant 0 : i32
    %c0_i32_0 = arith.constant 0 : i32
    return %arg0, %c0_i32 : i32, i32
  }
  func.func @transform_1(%arg0: i32, %arg1: i32) -> (i32, i32) {
    %c0_i32 = arith.constant 0 : i32
    %c0_i32_0 = arith.constant 0 : i32
    return %c0_i32, %arg1 : i32, i32
  }
  func.func @transform_2(%arg0: i32, %arg1: i32) -> (i32, i32) {
    %c0_i32 = arith.constant 0 : i32
    %c0_i32_0 = arith.constant 0 : i32
    return %c0_i32, %arg1 : i32, i32
  }
  func.func @transform_3(%arg0: i32, %arg1: i32) -> (i32, i32) {
    %c0_i32 = arith.constant 0 : i32
    %c0_i32_0 = arith.constant 0 : i32
    return %c0_i32, %arg1 : i32, i32
  }
  func.func @transform_4(%arg0: i32, %arg1: i32) -> (i32, i32) {
    %c0_i32 = arith.constant 0 : i32
    return %arg0, %arg1 : i32, i32
  }
}

</mosaic_0001>

<llo_original>
// kernel: tpu_custom_call.1
$region0: #{tpu_custom_call.1}
  #allocation0 [shape = 'u32[]', space=smem, size = 0x4, offset = 0x4, fixed_abs, tag = 'smem constant byte address 0x4 - core index']
  #allocation1 [shape = 'u32[144,128]{1,0:T(1,128)}', space=vmem, size = 0x12000, scoped, tag = 'internal scratch']
  %s0 = inlined_call_operand.vmem [shape: bf16[2048,147], index: 0, kind: input, shape index: {}]
  %s1 = inlined_call_operand.vmem [shape: bf16[147,64], index: 1, kind: input, shape index: {}]
  %s2 = inlined_call_operand.vmem [shape: f32[1,64], index: 2, kind: input, shape index: {}]
  %s3 = inlined_call_operand.vmem [shape: f32[1,64], index: 3, kind: input, shape index: {}]
  %s4 = inlined_call_operand.vmem [shape: f32[2048,64], index: 4, kind: output, shape index: {}]
  %s5 = sld [smem:[#allocation0]]
  $region49: #{tpu_custom_call.1} parent=0
    _
  %s7 = ssub.s32 1, %s5
  %s8 = scalar_select 0, %s7, %s5
  loop: start=0, step=1, limit=6
  $region2: #{tpu_custom_call.1} parent=0 // loop_pre_header
    _
  $region3: #{tpu_custom_call.1} parent=0 // loop_header
    %s10 = sphi 0, %s14
    %p11 = scmp.ge.s32.totalorder %s10, 6
    %s17 = sphi 0, %s29
    %s18 = sphi 0, %s25
    %s19 = sphi 0, %s17
    %s20 = sphi 0, %s18
    %s21 = sphi 0, %s19
    %s22 = sphi 0, %s20
    %s32 = sphi 0, %s34
    %s35 = sphi 0, %s32
    %s36 = sphi 0, %s35
    %s52 = sphi 0, %s36
    %s58 = sphi 0, %s60
    %s61 = sphi 0, %s58
    %s62 = sphi 0, %s61
    %s78 = sphi 0, %s62
    %s84 = sphi 0, %s86
    %s87 = sphi 0, %s84
    %s88 = sphi 0, %s87
    %s104 = sphi 0, %s88
    %s110 = sphi 0, %s112
    %s113 = sphi 0, %s110
    %s114 = sphi 0, %s113
    %s130 = sphi 0, %s114
    %s138 = sphi 0, %s140
    %s141 = sphi 0, %s138
    %s142 = sphi 0, %s141
    %s158 = sphi 0, %s142
  $region4: #{tpu_custom_call.1} parent=0 // loop_header_branch
    %13 = sbr.rel (%p11) target = $region8
  $region5: #{tpu_custom_call.1} parent=0 // loop_body
    %s15 = ssub.s32 %s10, 1
    %s16 = ssub.s32 %s10, 2
    %s23 = sadd.s32 1, %s18
    %p24 = scmp.ge.s32.totalorder %s23, 1
    %s25 = scalar_select %p24, 0, %s23
    %s26 = sadd.s32 1, %s17
    %s27 = scalar_select %p24, %s26, %s17
    %p28 = scmp.ge.s32.totalorder %s27, 4
    %s29 = scalar_select %p28, 0, %s27
    %s30 = ssub.s32 %s17, %s29
    %p31 = scmp.eq.s32.totalorder %s30, 0
    %s33 = sadd.s32 %s32, 1
    %s34 = scalar_select %p31, %s32, %s33
    %p37 = pneg %p31
    %p38 = scmp.eq.s32.totalorder %s10, 3
    %p39 = por %p37, %p38
    %p40 = scmp.ne.s32.totalorder %s32, %s35
    %p41 = scmp.eq.s32.totalorder %s10, 0
    %p42 = por %p40, %p41
    %p43 = scmp.ne.s32.totalorder %s32, %s35
    %p44 = scmp.eq.s32.totalorder %s15, 3
    %p45 = por %p43, %p44
    %p46 = scmp.ne.s32.totalorder %s35, %s36
    %p47 = scmp.eq.s32.totalorder %s15, 0
    %p48 = por %p46, %p47
    %p49 = scmp.ne.s32.totalorder %s35, %s36
    %p50 = scmp.eq.s32.totalorder %s16, 3
    %p51 = por %p49, %p50
    %p53 = scmp.ne.s32.totalorder %s36, %s52
    %p54 = scmp.eq.s32.totalorder %s16, 0
    %p55 = por %p53, %p54
    %s56 = ssub.s32 %s18, %s25
    %p57 = scmp.eq.s32.totalorder %s56, 0
    %s59 = sadd.s32 %s58, 1
    %s60 = scalar_select %p57, %s58, %s59
    %p63 = pneg %p57
    %p64 = scmp.eq.s32.totalorder %s10, 3
    %p65 = por %p63, %p64
    %p66 = scmp.ne.s32.totalorder %s58, %s61
    %p67 = scmp.eq.s32.totalorder %s10, 0
    %p68 = por %p66, %p67
    %p69 = scmp.ne.s32.totalorder %s58, %s61
    %p70 = scmp.eq.s32.totalorder %s15, 3
    %p71 = por %p69, %p70
    %p72 = scmp.ne.s32.totalorder %s61, %s62
    %p73 = scmp.eq.s32.totalorder %s15, 0
    %p74 = por %p72, %p73
    %p75 = scmp.ne.s32.totalorder %s61, %s62
    %p76 = scmp.eq.s32.totalorder %s16, 3
    %p77 = por %p75, %p76
    %p79 = scmp.ne.s32.totalorder %s62, %s78
    %p80 = scmp.eq.s32.totalorder %s16, 0
    %p81 = por %p79, %p80
    %s82 = ssub.s32 %s18, %s25
    %p83 = scmp.eq.s32.totalorder %s82, 0
    %s85 = sadd.s32 %s84, 1
    %s86 = scalar_select %p83, %s84, %s85
    %p89 = pneg %p83
    %p90 = scmp.eq.s32.totalorder %s10, 3
    %p91 = por %p89, %p90
    %p92 = scmp.ne.s32.totalorder %s84, %s87
    %p93 = scmp.eq.s32.totalorder %s10, 0
    %p94 = por %p92, %p93
    %p95 = scmp.ne.s32.totalorder %s84, %s87
    %p96 = scmp.eq.s32.totalorder %s15, 3
    %p97 = por %p95, %p96
    %p98 = scmp.ne.s32.totalorder %s87, %s88
    %p99 = scmp.eq.s32.totalorder %s15, 0
    %p100 = por %p98, %p99
    %p101 = scmp.ne.s32.totalorder %s87, %s88
    %p102 = scmp.eq.s32.totalorder %s16, 3
    %p103 = por %p101, %p102
    %p105 = scmp.ne.s32.totalorder %s88, %s104
    %p106 = scmp.eq.s32.totalorder %s16, 0
    %p107 = por %p105, %p106
    %s108 = ssub.s32 %s18, %s25
    %p109 = scmp.eq.s32.totalorder %s108, 0
    %s111 = sadd.s32 %s110, 1
    %s112 = scalar_select %p109, %s110, %s111
    %p115 = pneg %p109
    %p116 = scmp.eq.s32.totalorder %s10, 3
    %p117 = por %p115, %p116
    %p118 = scmp.ne.s32.totalorder %s110, %s113
    %p119 = scmp.eq.s32.totalorder %s10, 0
    %p120 = por %p118, %p119
    %p121 = scmp.ne.s32.totalorder %s110, %s113
    %p122 = scmp.eq.s32.totalorder %s15, 3
    %p123 = por %p121, %p122
    %p124 = scmp.ne.s32.totalorder %s113, %s114
    %p125 = scmp.eq.s32.totalorder %s15, 0
    %p126 = por %p124, %p125
    %p127 = scmp.ne.s32.totalorder %s113, %s114
    %p128 = scmp.eq.s32.totalorder %s16, 3
    %p129 = por %p127, %p128
    %p131 = scmp.ne.s32.totalorder %s114, %s130
    %p132 = scmp.eq.s32.totalorder %s16, 0
    %p133 = por %p131, %p132
    %s134 = ssub.s32 %s17, %s29
    %s135 = ssub.s32 %s18, %s25
    %s136 = sor.u32 %s134, %s135
    %p137 = scmp.eq.s32.totalorder %s136, 0
    %s139 = sadd.s32 %s138, 1
    %s140 = scalar_select %p137, %s138, %s139
    %p143 = pneg %p137
    %p144 = scmp.eq.s32.totalorder %s10, 3
    %p145 = por %p143, %p144
    %p146 = scmp.ne.s32.totalorder %s138, %s141
    %p147 = scmp.eq.s32.totalorder %s10, 0
    %p148 = por %p146, %p147
    %p149 = scmp.ne.s32.totalorder %s138, %s141
    %p150 = scmp.eq.s32.totalorder %s15, 3
    %p151 = por %p149, %p150
    %p152 = scmp.ne.s32.totalorder %s141, %s142
    %p153 = scmp.eq.s32.totalorder %s15, 0
    %p154 = por %p152, %p153
    %p155 = scmp.ne.s32.totalorder %s141, %s142
    %p156 = scmp.eq.s32.totalorder %s16, 3
    %p157 = por %p155, %p156
    %p159 = scmp.ne.s32.totalorder %s142, %s158
    %p160 = scmp.eq.s32.totalorder %s16, 0
    %p161 = por %p159, %p160
    %p162 = scmp.le.s32.totalorder 1, %s10
    %p163 = scmp.lt.s32.totalorder %s10, 5
    %p164 = pnand %p162, %p163
    %p165 = pneg %p164
    // Predicated region
    $region9: #{tpu_custom_call.1} parent=5 // pred_check
      _
    $region10: #{tpu_custom_call.1} parent=5 // pred_check_branch
      %167 = sbr.rel (%p164) target = $region12
    $region11: #{tpu_custom_call.1} parent=5 // pred_region
      %s168 = ssub.s32 %s10, 1
      // Predicated region
      $region13: #{tpu_custom_call.1} parent=11 // pred_check
        %p169 = pneg %p74
      $region14: #{tpu_custom_call.1} parent=11 // pred_check_branch
        %171 = sbr.rel (%p169) target = $region16
      $region15: #{tpu_custom_call.1} parent=11 // pred_region
        %p172 = scmp.lt.s32.totalorder %s20, 0
        %s173 = scalar_select %p172, %s20, 0
        %s174 = smul.addr %s173, 4
        %s175 = scalar_lea.vmem %s1, %s174
      $region16: #{tpu_custom_call.1} parent=11 // pred_fallthru
        _
      // Predicated region
      $region17: #{tpu_custom_call.1} parent=11 // pred_check
        %p176 = pneg %p100
      $region18: #{tpu_custom_call.1} parent=11 // pred_check_branch
        %178 = sbr.rel (%p176) target = $region20
      $region19: #{tpu_custom_call.1} parent=11 // pred_region
        %p179 = scmp.lt.s32.totalorder %s20, 0
        %s180 = scalar_select %p179, %s20, 0
        %s181 = scalar_lea.vmem %s2, %s180
      $region20: #{tpu_custom_call.1} parent=11 // pred_fallthru
        _
      // Predicated region
      $region21: #{tpu_custom_call.1} parent=11 // pred_check
        %p182 = pneg %p126
      $region22: #{tpu_custom_call.1} parent=11 // pred_check_branch
        %184 = sbr.rel (%p182) target = $region24
      $region23: #{tpu_custom_call.1} parent=11 // pred_region
        %p185 = scmp.lt.s32.totalorder %s20, 0
        %s186 = scalar_select %p185, %s20, 0
        %s187 = scalar_lea.vmem %s3, %s186
      $region24: #{tpu_custom_call.1} parent=11 // pred_fallthru
        _
    $region12: #{tpu_custom_call.1} parent=5 // pred_fallthru
      _
    %p188 = scmp.lt.s32.totalorder %s10, 4
    // Predicated region
    $region25: #{tpu_custom_call.1} parent=5 // pred_check
      %p189 = pneg %p188
    $region26: #{tpu_custom_call.1} parent=5 // pred_check_branch
      %191 = sbr.rel (%p189) target = $region28
    $region27: #{tpu_custom_call.1} parent=5 // pred_region
      // Predicated region
      $region29: #{tpu_custom_call.1} parent=27 // pred_check
        %p192 = pneg %p42
      $region30: #{tpu_custom_call.1} parent=27 // pred_check_branch
        %194 = sbr.rel (%p192) target = $region32
      $region31: #{tpu_custom_call.1} parent=27 // pred_region
        %s195 = smul.u32 64, %s17
        %p196 = scmp.lt.s32.totalorder %s195, 255
        %s197 = scalar_select %p196, %s195, 255
        %s198 = smul.addr %s197, 2
        %s199 = smul.addr %s198, 4
        %s200 = scalar_lea.vmem %s0, %s199
        %s201 = smul.u32 64, %s17
      $region32: #{tpu_custom_call.1} parent=27 // pred_fallthru
        _
    $region28: #{tpu_custom_call.1} parent=5 // pred_fallthru
      _
    %p202 = scmp.le.s32.totalorder 1, %s10
    %p203 = scmp.lt.s32.totalorder %s10, 5
    %p204 = pnand %p202, %p203
    %p205 = pneg %p204
    // Predicated region
    $region33: #{tpu_custom_call.1} parent=5 // pred_check
      _
    $region34: #{tpu_custom_call.1} parent=5 // pred_check_branch
      %207 = sbr.rel (%p204) target = $region36
    $region35: #{tpu_custom_call.1} parent=5 // pred_region
      %s208 = ssub.s32 %s10, 1
      %s209 = smul.u32 64, %s19
      %p210 = scmp.lt.s32.totalorder %s209, 255
      %s211 = scalar_select %p210, %s209, 255
      %s212 = smul.addr %s211, 2
      %s213 = smul.addr %s212, 4
      %s214 = scalar_lea.vmem %s0, %s213
      %p215 = pneg %p48
      %p216 = pneg %p45
      %p217 = scmp.lt.s32.totalorder %s20, 0
      %s218 = scalar_select %p217, %s20, 0
      %s219 = smul.addr %s218, 4
      %s220 = scalar_lea.vmem %s1, %s219
      %p221 = pneg %p74
      %p222 = pneg %p71
      %p223 = scmp.lt.s32.totalorder %s20, 0
      %s224 = scalar_select %p223, %s20, 0
      %s225 = scalar_lea.vmem %s2, %s224
      %p226 = pneg %p100
      %p227 = pneg %p97
      %p228 = scmp.lt.s32.totalorder %s20, 0
      %s229 = scalar_select %p228, %s20, 0
      %s230 = scalar_lea.vmem %s3, %s229
      %p231 = pneg %p126
      %p232 = pneg %p123
      %p233 = pneg %p154
      %p234 = pneg %p151
      %s235 = smul.u32 64, %s19
      %p236 = scmp.lt.s32.totalorder %s235, 255
      %s237 = scalar_select %p236, %s235, 255
      %p238 = scmp.lt.s32.totalorder %s20, 0
      %s239 = scalar_select %p238, %s20, 0
      %s240 = sadd.s32 %s239, %s237
      %s241 = smul.addr %s240, 8
      %s242 = scalar_lea.vmem %s4, %s241
      %s243 = smul.u32 64, %s19
      %p244 = scmp.lt.s32.totalorder %s243, 255
      %s245 = scalar_select %p244, %s243, 255
      %s246 = smul.addr %s245, 2
      %s247 = smul.addr %s246, 4
      %s248 = scalar_lea.vmem %s0, %s247
      %s249 = smul.u32 64, %s19
      %p250 = scmp.lt.s32.totalorder %s20, 0
      %s251 = scalar_select %p250, %s20, 0
      %s252 = smul.addr %s251, 4
      %s253 = scalar_lea.vmem %s1, %s252
      %p254 = scmp.lt.s32.totalorder %s20, 0
      %s255 = scalar_select %p254, %s20, 0
      %s256 = scalar_lea.vmem %s2, %s255
      %p257 = scmp.lt.s32.totalorder %s20, 0
      %s258 = scalar_select %p257, %s20, 0
      %s259 = scalar_lea.vmem %s3, %s258
      %s260 = smul.u32 64, %s19
      %p261 = scmp.lt.s32.totalorder %s260, 255
      %s262 = scalar_select %p261, %s260, 255
      %p263 = scmp.lt.s32.totalorder %s20, 0
      %s264 = scalar_select %p263, %s20, 0
      %s265 = sadd.s32 %s264, %s262
      %s266 = smul.addr %s265, 8
      %s267 = scalar_lea.vmem %s4, %s266
      %s268 = smul.u32 64, %s19
      %v270 = vld [vmem:[%s248] sm:$0xff]
      %v271 = vld [vmem:[%s248 + $0x8] sm:$0xff]
      %v272 = vld [vmem:[%s248 + $0x10] sm:$0xff]
      %v273 = vld [vmem:[%s248 + $0x18] sm:$0xff]
      %v274 = vld [vmem:[%s248 + $0x20] sm:$0xff]
      %v275 = vld [vmem:[%s248 + $0x28] sm:$0xff]
      %v276 = vld [vmem:[%s248 + $0x30] sm:$0xff]
      %v277 = vld [vmem:[%s248 + $0x38] sm:$0xff]
      %v278 = vld [vmem:[%s248 + $0x40] sm:$0xff]
      %v279 = vld [vmem:[%s248 + $0x48] sm:$0xff]
      %v280 = vld [vmem:[%s248 + $0x50] sm:$0xff]
      %v281 = vld [vmem:[%s248 + $0x58] sm:$0xff]
      %v282 = vld [vmem:[%s248 + $0x60] sm:$0xff]
      %v283 = vld [vmem:[%s248 + $0x68] sm:$0xff]
      %v284 = vld [vmem:[%s248 + $0x70] sm:$0xff]
      %v285 = vld [vmem:[%s248 + $0x78] sm:$0xff]
      %v286 = vld [vmem:[%s248 + $0x80] sm:$0xff]
      %v287 = vld [vmem:[%s248 + $0x88] sm:$0xff]
      %v288 = vld [vmem:[%s248 + $0x90] sm:$0xff]
      %v289 = vld [vmem:[%s248 + $0x98] sm:$0xff]
      %v290 = vld [vmem:[%s248 + $0xa0] sm:$0xff]
      %v291 = vld [vmem:[%s248 + $0xa8] sm:$0xff]
      %v292 = vld [vmem:[%s248 + $0xb0] sm:$0xff]
      %v293 = vld [vmem:[%s248 + $0xb8] sm:$0xff]
      %v294 = vld [vmem:[%s248 + $0xc0] sm:$0xff]
      %v295 = vld [vmem:[%s248 + $0xc8] sm:$0xff]
      %v296 = vld [vmem:[%s248 + $0xd0] sm:$0xff]
      %v297 = vld [vmem:[%s248 + $0xd8] sm:$0xff]
      %v298 = vld [vmem:[%s248 + $0xe0] sm:$0xff]
      %v299 = vld [vmem:[%s248 + $0xe8] sm:$0xff]
      %v300 = vld [vmem:[%s248 + $0xf0] sm:$0xff]
      %v301 = vld [vmem:[%s248 + $0xf8] sm:$0xff]
      %v302 = vld [vmem:[%s248 + $0x100] sm:$0xff]
      %v303 = vld [vmem:[%s248 + $0x108] sm:$0xff]
      %v304 = vld [vmem:[%s248 + $0x110] sm:$0xff]
      %v305 = vld [vmem:[%s248 + $0x118] sm:$0xff]
      %v306 = vld [vmem:[%s248 + $0x120] sm:$0xff]
      %v307 = vld [vmem:[%s248 + $0x128] sm:$0xff]
      %v308 = vld [vmem:[%s248 + $0x130] sm:$0xff]
      %v309 = vld [vmem:[%s248 + $0x138] sm:$0xff]
      %v310 = vld [vmem:[%s248 + $0x140] sm:$0xff]
      %v311 = vld [vmem:[%s248 + $0x148] sm:$0xff]
      %v312 = vld [vmem:[%s248 + $0x150] sm:$0xff]
      %v313 = vld [vmem:[%s248 + $0x158] sm:$0xff]
      %v314 = vld [vmem:[%s248 + $0x160] sm:$0xff]
      %v315 = vld [vmem:[%s248 + $0x168] sm:$0xff]
      %v316 = vld [vmem:[%s248 + $0x170] sm:$0xff]
      %v317 = vld [vmem:[%s248 + $0x178] sm:$0xff]
      %v318 = vld [vmem:[%s248 + $0x180] sm:$0xff]
      %v319 = vld [vmem:[%s248 + $0x188] sm:$0xff]
      %v320 = vld [vmem:[%s248 + $0x190] sm:$0xff]
      %v321 = vld [vmem:[%s248 + $0x198] sm:$0xff]
      %v322 = vld [vmem:[%s248 + $0x1a0] sm:$0xff]
      %v323 = vld [vmem:[%s248 + $0x1a8] sm:$0xff]
      %v324 = vld [vmem:[%s248 + $0x1b0] sm:$0xff]
      %v325 = vld [vmem:[%s248 + $0x1b8] sm:$0xff]
      %v326 = vld [vmem:[%s248 + $0x1c0] sm:$0xff]
      %v327 = vld [vmem:[%s248 + $0x1c8] sm:$0xff]
      %v328 = vld [vmem:[%s248 + $0x1d0] sm:$0xff]
      %v329 = vld [vmem:[%s248 + $0x1d8] sm:$0xff]
      %v330 = vld [vmem:[%s248 + $0x1e0] sm:$0xff]
      %v331 = vld [vmem:[%s248 + $0x1e8] sm:$0xff]
      %v332 = vld [vmem:[%s248 + $0x1f0] sm:$0xff]
      %v333 = vld [vmem:[%s248 + $0x1f8] sm:$0xff]
      %v334 = vld [vmem:[%s253] sm:$0xf]
      %v335 = vld [vmem:[%s253 + $0x4] sm:$0xf]
      %v336 = vld [vmem:[%s253 + $0x8] sm:$0xf]
      %v337 = vld [vmem:[%s253 + $0xc] sm:$0xf]
      %v338 = vld [vmem:[%s253 + $0x10] sm:$0xf]
      %v339 = vld [vmem:[%s253 + $0x14] sm:$0xf]
      %v340 = vld [vmem:[%s253 + $0x18] sm:$0xf]
      %v341 = vld [vmem:[%s253 + $0x1c] sm:$0xf]
      %v342 = vld [vmem:[%s253 + $0x20] sm:$0xf]
      %v343 = vld [vmem:[%s253 + $0x24] sm:$0xf]
      %v344 = vld [vmem:[%s253 + $0x28] sm:$0xf]
      %v345 = vld [vmem:[%s253 + $0x2c] sm:$0xf]
      %v346 = vld [vmem:[%s253 + $0x30] sm:$0xf]
      %v347 = vld [vmem:[%s253 + $0x34] sm:$0xf]
      %v348 = vld [vmem:[%s253 + $0x38] sm:$0xf]
      %v349 = vld [vmem:[%s253 + $0x3c] sm:$0xf]
      %v350 = vld [vmem:[%s253 + $0x40] sm:$0xf]
      %v351 = vld [vmem:[%s253 + $0x44] sm:$0xf]
      %v352 = vld [vmem:[%s253 + $0x48] sm:$0x3]
      %v417 = vunpack.c.l.b16 %v270
      %v418 = vunpack.c.h.b16 %v270
      %v419 = vunpack.c.l.b16 %v271
      %v420 = vunpack.c.h.b16 %v271
      %v421 = vunpack.c.l.b16 %v272
      %v422 = vunpack.c.h.b16 %v272
      %v423 = vunpack.c.l.b16 %v273
      %v424 = vunpack.c.h.b16 %v273
      %v425 = vunpack.c.l.b16 %v274
      %v426 = vunpack.c.h.b16 %v274
      %v427 = vunpack.c.l.b16 %v275
      %v428 = vunpack.c.h.b16 %v275
      %v429 = vunpack.c.l.b16 %v276
      %v430 = vunpack.c.h.b16 %v276
      %v431 = vunpack.c.l.b16 %v277
      %v432 = vunpack.c.h.b16 %v277
      %v433 = vunpack.c.l.b16 %v278
      %v434 = vunpack.c.h.b16 %v278
      %v435 = vunpack.c.l.b16 %v279
      %v436 = vunpack.c.h.b16 %v279
      %v437 = vunpack.c.l.b16 %v280
      %v438 = vunpack.c.h.b16 %v280
      %v439 = vunpack.c.l.b16 %v281
      %v440 = vunpack.c.h.b16 %v281
      %v441 = vunpack.c.l.b16 %v282
      %v442 = vunpack.c.h.b16 %v282
      %v443 = vunpack.c.l.b16 %v283
      %v444 = vunpack.c.h.b16 %v283
      %v445 = vunpack.c.l.b16 %v284
      %v446 = vunpack.c.h.b16 %v284
      %v447 = vunpack.c.l.b16 %v285
      %v448 = vunpack.c.h.b16 %v285
      %v449 = vunpack.c.l.b16 %v286
      %v450 = vunpack.c.h.b16 %v286
      %v451 = vunpack.c.l.b16 %v287
      %v452 = vunpack.c.h.b16 %v287
      %v453 = vunpack.c.l.b16 %v288
      %v454 = vunpack.c.h.b16 %v288
      %v455 = vunpack.c.l.b16 %v289
      %v456 = vunpack.c.h.b16 %v289
      %v457 = vunpack.c.l.b16 %v290
      %v458 = vunpack.c.h.b16 %v290
      %v459 = vunpack.c.l.b16 %v291
      %v460 = vunpack.c.h.b16 %v291
      %v461 = vunpack.c.l.b16 %v292
      %v462 = vunpack.c.h.b16 %v292
      %v463 = vunpack.c.l.b16 %v293
      %v464 = vunpack.c.h.b16 %v293
      %v465 = vunpack.c.l.b16 %v294
      %v466 = vunpack.c.h.b16 %v294
      %v467 = vunpack.c.l.b16 %v295
      %v468 = vunpack.c.h.b16 %v295
      %v469 = vunpack.c.l.b16 %v296
      %v470 = vunpack.c.h.b16 %v296
      %v471 = vunpack.c.l.b16 %v297
      %v472 = vunpack.c.h.b16 %v297
      %v473 = vunpack.c.l.b16 %v298
      %v474 = vunpack.c.h.b16 %v298
      %v475 = vunpack.c.l.b16 %v299
      %v476 = vunpack.c.h.b16 %v299
      %v477 = vunpack.c.l.b16 %v300
      %v478 = vunpack.c.h.b16 %v300
      %v479 = vunpack.c.l.b16 %v301
      %v480 = vunpack.c.h.b16 %v301
      %v481 = vunpack.c.l.b16 %v302
      %v482 = vunpack.c.h.b16 %v302
      %v483 = vunpack.c.l.b16 %v303
      %v484 = vunpack.c.h.b16 %v303
      %v485 = vunpack.c.l.b16 %v304
      %v486 = vunpack.c.h.b16 %v304
      %v487 = vunpack.c.l.b16 %v305
      %v488 = vunpack.c.h.b16 %v305
      %v489 = vunpack.c.l.b16 %v306
      %v490 = vunpack.c.h.b16 %v306
      %v491 = vunpack.c.l.b16 %v307
      %v492 = vunpack.c.h.b16 %v307
      %v493 = vunpack.c.l.b16 %v308
      %v494 = vunpack.c.h.b16 %v308
      %v495 = vunpack.c.l.b16 %v309
      %v496 = vunpack.c.h.b16 %v309
      %v497 = vunpack.c.l.b16 %v310
      %v498 = vunpack.c.h.b16 %v310
      %v499 = vunpack.c.l.b16 %v311
      %v500 = vunpack.c.h.b16 %v311
      %v501 = vunpack.c.l.b16 %v312
      %v502 = vunpack.c.h.b16 %v312
      %v503 = vunpack.c.l.b16 %v313
      %v504 = vunpack.c.h.b16 %v313
      %v505 = vunpack.c.l.b16 %v314
      %v506 = vunpack.c.h.b16 %v314
      %v507 = vunpack.c.l.b16 %v315
      %v508 = vunpack.c.h.b16 %v315
      %v509 = vunpack.c.l.b16 %v316
      %v510 = vunpack.c.h.b16 %v316
      %v511 = vunpack.c.l.b16 %v317
      %v512 = vunpack.c.h.b16 %v317
      %v513 = vunpack.c.l.b16 %v318
      %v514 = vunpack.c.h.b16 %v318
      %v515 = vunpack.c.l.b16 %v319
      %v516 = vunpack.c.h.b16 %v319
      %v517 = vunpack.c.l.b16 %v320
      %v518 = vunpack.c.h.b16 %v320
      %v519 = vunpack.c.l.b16 %v321
      %v520 = vunpack.c.h.b16 %v321
      %v521 = vunpack.c.l.b16 %v322
      %v522 = vunpack.c.h.b16 %v322
      %v523 = vunpack.c.l.b16 %v323
      %v524 = vunpack.c.h.b16 %v323
      %v525 = vunpack.c.l.b16 %v324
      %v526 = vunpack.c.h.b16 %v324
      %v527 = vunpack.c.l.b16 %v325
      %v528 = vunpack.c.h.b16 %v325
      %v529 = vunpack.c.l.b16 %v326
      %v530 = vunpack.c.h.b16 %v326
      %v531 = vunpack.c.l.b16 %v327
      %v532 = vunpack.c.h.b16 %v327
      %v533 = vunpack.c.l.b16 %v328
      %v534 = vunpack.c.h.b16 %v328
      %v535 = vunpack.c.l.b16 %v329
      %v536 = vunpack.c.h.b16 %v329
      %v537 = vunpack.c.l.b16 %v330
      %v538 = vunpack.c.h.b16 %v330
      %v539 = vunpack.c.l.b16 %v331
      %v540 = vunpack.c.h.b16 %v331
      %v541 = vunpack.c.l.b16 %v332
      %v542 = vunpack.c.h.b16 %v332
      %v543 = vunpack.c.l.b16 %v333
      %v544 = vunpack.c.h.b16 %v333
      %v545 = vpack.c.b16 %v419, %v417
      %v546 = vpack.c.b16 %v420, %v418
      %v547 = vpack.c.b16 %v423, %v421
      %v548 = vpack.c.b16 %v424, %v422
      %v549 = vpack.c.b16 %v427, %v425
      %v550 = vpack.c.b16 %v428, %v426
      %v551 = vpack.c.b16 %v431, %v429
      %v552 = vpack.c.b16 %v432, %v430
      %v553 = vpack.c.b16 %v435, %v433
      %v554 = vpack.c.b16 %v436, %v434
      %v555 = vpack.c.b16 %v439, %v437
      %v556 = vpack.c.b16 %v440, %v438
      %v557 = vpack.c.b16 %v443, %v441
      %v558 = vpack.c.b16 %v444, %v442
      %v559 = vpack.c.b16 %v447, %v445
      %v560 = vpack.c.b16 %v448, %v446
      %v561 = vpack.c.b16 %v451, %v449
      %v562 = vpack.c.b16 %v452, %v450
      %v563 = vpack.c.b16 %v455, %v453
      %v564 = vpack.c.b16 %v456, %v454
      %v565 = vpack.c.b16 %v459, %v457
      %v566 = vpack.c.b16 %v460, %v458
      %v567 = vpack.c.b16 %v463, %v461
      %v568 = vpack.c.b16 %v464, %v462
      %v569 = vpack.c.b16 %v467, %v465
      %v570 = vpack.c.b16 %v468, %v466
      %v571 = vpack.c.b16 %v471, %v469
      %v572 = vpack.c.b16 %v472, %v470
      %v573 = vpack.c.b16 %v475, %v473
      %v574 = vpack.c.b16 %v476, %v474
      %v575 = vpack.c.b16 %v479, %v477
      %v576 = vpack.c.b16 %v480, %v478
      %v577 = vpack.c.b16 %v483, %v481
      %v578 = vpack.c.b16 %v484, %v482
      %v579 = vpack.c.b16 %v487, %v485
      %v580 = vpack.c.b16 %v488, %v486
      %v581 = vpack.c.b16 %v491, %v489
      %v582 = vpack.c.b16 %v492, %v490
      %v583 = vpack.c.b16 %v495, %v493
      %v584 = vpack.c.b16 %v496, %v494
      %v585 = vpack.c.b16 %v499, %v497
      %v586 = vpack.c.b16 %v500, %v498
      %v587 = vpack.c.b16 %v503, %v501
      %v588 = vpack.c.b16 %v504, %v502
      %v589 = vpack.c.b16 %v507, %v505
      %v590 = vpack.c.b16 %v508, %v506
      %v591 = vpack.c.b16 %v511, %v509
      %v592 = vpack.c.b16 %v512, %v510
      %v593 = vpack.c.b16 %v515, %v513
      %v594 = vpack.c.b16 %v516, %v514
      %v595 = vpack.c.b16 %v519, %v517
      %v596 = vpack.c.b16 %v520, %v518
      %v597 = vpack.c.b16 %v523, %v521
      %v598 = vpack.c.b16 %v524, %v522
      %v599 = vpack.c.b16 %v527, %v525
      %v600 = vpack.c.b16 %v528, %v526
      %v601 = vpack.c.b16 %v531, %v529
      %v602 = vpack.c.b16 %v532, %v530
      %v603 = vpack.c.b16 %v535, %v533
      %v604 = vpack.c.b16 %v536, %v534
      %v605 = vpack.c.b16 %v539, %v537
      %v606 = vpack.c.b16 %v540, %v538
      %v607 = vpack.c.b16 %v543, %v541
      %v608 = vpack.c.b16 %v544, %v542
      %v660 = vunpack.c.l.b16 %v334
      %v661 = vunpack.c.l.b16 %v335
      %v662 = vunpack.c.l.b16 %v336
      %v663 = vunpack.c.l.b16 %v337
      %v664 = vunpack.c.l.b16 %v338
      %v665 = vunpack.c.l.b16 %v339
      %v666 = vunpack.c.l.b16 %v340
      %v667 = vunpack.c.l.b16 %v341
      %v668 = vunpack.c.l.b16 %v342
      %v669 = vunpack.c.l.b16 %v343
      %v670 = vunpack.c.l.b16 %v344
      %v671 = vunpack.c.l.b16 %v345
      %v672 = vunpack.c.l.b16 %v346
      %v673 = vunpack.c.l.b16 %v347
      %v674 = vunpack.c.l.b16 %v348
      %v675 = vunpack.c.l.b16 %v349
      %v676 = vunpack.c.l.b16 %v350
      %v677 = vunpack.c.l.b16 %v351
      %v678 = vunpack.c.l.b16 %v352
      %v679 = vpack.c.b16 %v661, %v660
      %v680 = vpack.c.b16 %v663, %v662
      %v681 = vpack.c.b16 %v665, %v664
      %v682 = vpack.c.b16 %v667, %v666
      %v683 = vpack.c.b16 %v669, %v668
      %v684 = vpack.c.b16 %v671, %v670
      %v685 = vpack.c.b16 %v673, %v672
      %v686 = vpack.c.b16 %v675, %v674
      %v687 = vpack.c.b16 %v677, %v676
      %v688 = vpack.c.b16 %v678, %v678
      %vm698 = vcmask 154624
      %v700 = vsel %vm698, %v546, 0
      %v703 = vsel %vm698, %v548, 0
      %v706 = vsel %vm698, %v550, 0
      %v709 = vsel %vm698, %v552, 0
      %v712 = vsel %vm698, %v554, 0
      %v715 = vsel %vm698, %v556, 0
      %v718 = vsel %vm698, %v558, 0
      %v721 = vsel %vm698, %v560, 0
      %v724 = vsel %vm698, %v562, 0
      %v727 = vsel %vm698, %v564, 0
      %v730 = vsel %vm698, %v566, 0
      %v733 = vsel %vm698, %v568, 0
      %v736 = vsel %vm698, %v570, 0
      %v739 = vsel %vm698, %v572, 0
      %v742 = vsel %vm698, %v574, 0
      %v745 = vsel %vm698, %v576, 0
      %v748 = vsel %vm698, %v578, 0
      %v751 = vsel %vm698, %v580, 0
      %v754 = vsel %vm698, %v582, 0
      %v757 = vsel %vm698, %v584, 0
      %v760 = vsel %vm698, %v586, 0
      %v763 = vsel %vm698, %v588, 0
      %v766 = vsel %vm698, %v590, 0
      %v769 = vsel %vm698, %v592, 0
      %v772 = vsel %vm698, %v594, 0
      %v775 = vsel %vm698, %v596, 0
      %v778 = vsel %vm698, %v598, 0
      %v781 = vsel %vm698, %v600, 0
      %v784 = vsel %vm698, %v602, 0
      %v787 = vsel %vm698, %v604, 0
      %v790 = vsel %vm698, %v606, 0
      %v793 = vsel %vm698, %v608, 0
      %vm795 = vcmask 1040384
      %vm796 = vcmask 1041408
      %v797 = vsel %vm795, 4294967295, 65535
      %v798 = vsel %vm796, %v797, 0
      %v800 = vand.u32 %v688, %v798
      %802 = vmatprep.subr.bf16.mxu0 0
      %803 = vmatpush1.bf16.msra.mxu0 %v679
      %804 = vmatprep.subr.bf16.mxu0 0
      %805 = vmatpush1.bf16.msra.mxu0 %v680
      %806 = vmatprep.subr.bf16.mxu0 0
      %807 = vmatpush1.bf16.msra.mxu0 %v681
      %808 = vmatprep.subr.bf16.mxu0 0
      %809 = vmatpush1.bf16.msra.mxu0 %v682
      %810 = vmatprep.subr.bf16.mxu0 0
      %811 = vmatpush1.bf16.msra.mxu0 %v683
      %812 = vmatprep.subr.bf16.mxu0 0
      %813 = vmatpush1.bf16.msra.mxu0 %v684
      %814 = vmatprep.subr.bf16.mxu0 0
      %815 = vmatpush1.bf16.msra.mxu0 %v685
      %816 = vmatprep.subr.bf16.mxu0 0
      %817 = vmatpush1.bf16.msra.mxu0 %v686
      %818 = vmatprep.subr.bf16.mxu0 0
      %819 = vmatpush1.bf16.msra.mxu0 %v687
      %820 = vmatprep.subr.bf16.mxu0 0
      %821 = vmatpush1.bf16.msra.mxu0 %v800
      %822 = vmatprep.subr.bf16.mxu0 0
      %823 = vmatpush1.bf16.msra.mxu0 0
      %824 = vmatprep.subr.bf16.mxu0 0
      %825 = vmatpush1.bf16.msra.mxu0 0
      %826 = vmatprep.subr.bf16.mxu0 0
      %827 = vmatpush1.bf16.msra.mxu0 0
      %828 = vmatprep.subr.bf16.mxu0 0
      %829 = vmatpush1.bf16.msra.mxu0 0
      %830 = vmatprep.subr.bf16.mxu0 0
      %831 = vmatpush1.bf16.msra.mxu0 0
      %832 = vmatprep.subr.bf16.mxu0 0
      %833 = vmatpush1.bf16.msra.mxu0 0
      %834 = vmatprep.mubr.bf16.mxu0 %v700
      %835 = vmatmul.mubr.bf16.gmra.mrb[0].mxu0 %v545
      %v836 = vpop.f32.mrb[0].mxu0
      %v837 = vadd.f32 0.0, %v836
      %v838 = vpop.f32.mrb[0].mxu0
      %v839 = vpop.f32.mrb[0].mxu0
      %v840 = vadd.f32 0.0, %v839
      %v841 = vpop.f32.mrb[0].mxu0
      %842 = vmatprep.mubr.bf16.mxu0 %v703
      %843 = vmatmul.mubr.bf16.gmra.mrb[0].mxu0 %v547
      %v844 = vpop.f32.mrb[0].mxu0
      %v845 = vadd.f32 0.0, %v844
      %v846 = vpop.f32.mrb[0].mxu0
      %v847 = vpop.f32.mrb[0].mxu0
      %v848 = vadd.f32 0.0, %v847
      %v849 = vpop.f32.mrb[0].mxu0
      %850 = vmatprep.mubr.bf16.mxu0 %v706
      %851 = vmatmul.mubr.bf16.gmra.mrb[0].mxu0 %v549
      %v852 = vpop.f32.mrb[0].mxu0
      %v853 = vadd.f32 0.0, %v852
      %v854 = vpop.f32.mrb[0].mxu0
      %v855 = vpop.f32.mrb[0].mxu0
      %v856 = vadd.f32 0.0, %v855
      %v857 = vpop.f32.mrb[0].mxu0
      %858 = vmatprep.mubr.bf16.mxu0 %v709
      %859 = vmatmul.mubr.bf16.gmra.mrb[0].mxu0 %v551
      %v860 = vpop.f32.mrb[0].mxu0
      %v861 = vadd.f32 0.0, %v860
      %v862 = vpop.f32.mrb[0].mxu0
      %v863 = vpop.f32.mrb[0].mxu0
      %v864 = vadd.f32 0.0, %v863
      %v865 = vpop.f32.mrb[0].mxu0
      %866 = vmatprep.mubr.bf16.mxu0 %v712
      %867 = vmatmul.mubr.bf16.gmra.mrb[0].mxu0 %v553
      %v868 = vpop.f32.mrb[0].mxu0
      %v869 = vadd.f32 0.0, %v868
      %v870 = vpop.f32.mrb[0].mxu0
      %v871 = vpop.f32.mrb[0].mxu0
      %v872 = vadd.f32 0.0, %v871
      %v873 = vpop.f32.mrb[0].mxu0
      %874 = vmatprep.mubr.bf16.mxu0 %v715
      %875 = vmatmul.mubr.bf16.gmra.mrb[0].mxu0 %v555
      %v876 = vpop.f32.mrb[0].mxu0
      %v877 = vadd.f32 0.0, %v876
      %v878 = vpop.f32.mrb[0].mxu0
      %v879 = vpop.f32.mrb[0].mxu0
      %v880 = vadd.f32 0.0, %v879
      %v881 = vpop.f32.mrb[0].mxu0
      %882 = vmatprep.mubr.bf16.mxu0 %v718
      %883 = vmatmul.mubr.bf16.gmra.mrb[0].mxu0 %v557
      %v884 = vpop.f32.mrb[0].mxu0
      %v885 = vadd.f32 0.0, %v884
      %v886 = vpop.f32.mrb[0].mxu0
      %v887 = vpop.f32.mrb[0].mxu0
      %v888 = vadd.f32 0.0, %v887
      %v889 = vpop.f32.mrb[0].mxu0
      %890 = vmatprep.mubr.bf16.mxu0 %v721
      %891 = vmatmul.mubr.bf16.gmra.mrb[0].mxu0 %v559
      %v892 = vpop.f32.mrb[0].mxu0
      %v893 = vadd.f32 0.0, %v892
      %v894 = vpop.f32.mrb[0].mxu0
      %v895 = vpop.f32.mrb[0].mxu0
      %v896 = vadd.f32 0.0, %v895
      %v897 = vpop.f32.mrb[0].mxu0
      %898 = vmatprep.mubr.bf16.mxu0 %v724
      %899 = vmatmul.mubr.bf16.gmra.mrb[0].mxu0 %v561
      %v900 = vpop.f32.mrb[0].mxu0
      %v901 = vadd.f32 0.0, %v900
      %v902 = vpop.f32.mrb[0].mxu0
      %v903 = vpop.f32.mrb[0].mxu0
      %v904 = vadd.f32 0.0, %v903
      %v905 = vpop.f32.mrb[0].mxu0
      %906 = vmatprep.mubr.bf16.mxu0 %v727
      %907 = vmatmul.mubr.bf16.gmra.mrb[0].mxu0 %v563
      %v908 = vpop.f32.mrb[0].mxu0
      %v909 = vadd.f32 0.0, %v908
      %v910 = vpop.f32.mrb[0].mxu0
      %v911 = vpop.f32.mrb[0].mxu0
      %v912 = vadd.f32 0.0, %v911
      %v913 = vpop.f32.mrb[0].mxu0
      %914 = vmatprep.mubr.bf16.mxu0 %v730
      %915 = vmatmul.mubr.bf16.gmra.mrb[0].mxu0 %v565
      %v916 = vpop.f32.mrb[0].mxu0
      %v917 = vadd.f32 0.0, %v916
      %v918 = vpop.f32.mrb[0].mxu0
      %v919 = vpop.f32.mrb[0].mxu0
      %v920 = vadd.f32 0.0, %v919
      %v921 = vpop.f32.mrb[0].mxu0
      %922 = vmatprep.mubr.bf16.mxu0 %v733
      %923 = vmatmul.mubr.bf16.gmra.mrb[0].mxu0 %v567
      %v924 = vpop.f32.mrb[0].mxu0
      %v925 = vadd.f32 0.0, %v924
      %v926 = vpop.f32.mrb[0].mxu0
      %v927 = vpop.f32.mrb[0].mxu0
      %v928 = vadd.f32 0.0, %v927
      %v929 = vpop.f32.mrb[0].mxu0
      %930 = vmatprep.mubr.bf16.mxu0 %v736
      %931 = vmatmul.mubr.bf16.gmra.mrb[0].mxu0 %v569
      %v932 = vpop.f32.mrb[0].mxu0
      %v933 = vadd.f32 0.0, %v932
      %v934 = vpop.f32.mrb[0].mxu0
      %v935 = vpop.f32.mrb[0].mxu0
      %v936 = vadd.f32 0.0, %v935
      %v937 = vpop.f32.mrb[0].mxu0
      %938 = vmatprep.mubr.bf16.mxu0 %v739
      %939 = vmatmul.mubr.bf16.gmra.mrb[0].mxu0 %v571
      %v940 = vpop.f32.mrb[0].mxu0
      %v941 = vadd.f32 0.0, %v940
      %v942 = vpop.f32.mrb[0].mxu0
      %v943 = vpop.f32.mrb[0].mxu0
      %v944 = vadd.f32 0.0, %v943
      %v945 = vpop.f32.mrb[0].mxu0
      %946 = vmatprep.mubr.bf16.mxu0 %v742
      %947 = vmatmul.mubr.bf16.gmra.mrb[0].mxu0 %v573
      %v948 = vpop.f32.mrb[0].mxu0
      %v949 = vadd.f32 0.0, %v948
      %v950 = vpop.f32.mrb[0].mxu0
      %v951 = vpop.f32.mrb[0].mxu0
      %v952 = vadd.f32 0.0, %v951
      %v953 = vpop.f32.mrb[0].mxu0
      %954 = vmatprep.mubr.bf16.mxu0 %v745
      %955 = vmatmul.mubr.bf16.gmra.mrb[0].mxu0 %v575
      %v956 = vpop.f32.mrb[0].mxu0
      %v957 = vadd.f32 0.0, %v956
      %v958 = vpop.f32.mrb[0].mxu0
      %v959 = vpop.f32.mrb[0].mxu0
      %v960 = vadd.f32 0.0, %v959
      %v961 = vpop.f32.mrb[0].mxu0
      %962 = vmatprep.mubr.bf16.mxu0 %v748
      %963 = vmatmul.mubr.bf16.gmra.mrb[0].mxu0 %v577
      %v964 = vpop.f32.mrb[0].mxu0
      %v965 = vadd.f32 0.0, %v964
      %v966 = vpop.f32.mrb[0].mxu0
      %v967 = vpop.f32.mrb[0].mxu0
      %v968 = vadd.f32 0.0, %v967
      %v969 = vpop.f32.mrb[0].mxu0
      %970 = vmatprep.mubr.bf16.mxu0 %v751
      %971 = vmatmul.mubr.bf16.gmra.mrb[0].mxu0 %v579
      %v972 = vpop.f32.mrb[0].mxu0
      %v973 = vadd.f32 0.0, %v972
      %v974 = vpop.f32.mrb[0].mxu0
      %v975 = vpop.f32.mrb[0].mxu0
      %v976 = vadd.f32 0.0, %v975
      %v977 = vpop.f32.mrb[0].mxu0
      %978 = vmatprep.mubr.bf16.mxu0 %v754
      %979 = vmatmul.mubr.bf16.gmra.mrb[0].mxu0 %v581
      %v980 = vpop.f32.mrb[0].mxu0
      %v981 = vadd.f32 0.0, %v980
      %v982 = vpop.f32.mrb[0].mxu0
      %v983 = vpop.f32.mrb[0].mxu0
      %v984 = vadd.f32 0.0, %v983
      %v985 = vpop.f32.mrb[0].mxu0
      %986 = vmatprep.mubr.bf16.mxu0 %v757
      %987 = vmatmul.mubr.bf16.gmra.mrb[0].mxu0 %v583
      %v988 = vpop.f32.mrb[0].mxu0
      %v989 = vadd.f32 0.0, %v988
      %v990 = vpop.f32.mrb[0].mxu0
      %v991 = vpop.f32.mrb[0].mxu0
      %v992 = vadd.f32 0.0, %v991
      %v993 = vpop.f32.mrb[0].mxu0
      %994 = vmatprep.mubr.bf16.mxu0 %v760
      %995 = vmatmul.mubr.bf16.gmra.mrb[0].mxu0 %v585
      %v996 = vpop.f32.mrb[0].mxu0
      %v997 = vadd.f32 0.0, %v996
      %v998 = vpop.f32.mrb[0].mxu0
      %v999 = vpop.f32.mrb[0].mxu0
      %v1000 = vadd.f32 0.0, %v999
      %v1001 = vpop.f32.mrb[0].mxu0
      %1002 = vmatprep.mubr.bf16.mxu0 %v763
      %1003 = vmatmul.mubr.bf16.gmra.mrb[0].mxu0 %v587
      %v1004 = vpop.f32.mrb[0].mxu0
      %v1005 = vadd.f32 0.0, %v1004
      %v1006 = vpop.f32.mrb[0].mxu0
      %v1007 = vpop.f32.mrb[0].mxu0
      %v1008 = vadd.f32 0.0, %v1007
      %v1009 = vpop.f32.mrb[0].mxu0
      %1010 = vmatprep.mubr.bf16.mxu0 %v766
      %1011 = vmatmul.mubr.bf16.gmra.mrb[0].mxu0 %v589
      %v1012 = vpop.f32.mrb[0].mxu0
      %v1013 = vadd.f32 0.0, %v1012
      %v1014 = vpop.f32.mrb[0].mxu0
      %v1015 = vpop.f32.mrb[0].mxu0
      %v1016 = vadd.f32 0.0, %v1015
      %v1017 = vpop.f32.mrb[0].mxu0
      %1018 = vmatprep.mubr.bf16.mxu0 %v769
      %1019 = vmatmul.mubr.bf16.gmra.mrb[0].mxu0 %v591
      %v1020 = vpop.f32.mrb[0].mxu0
      %v1021 = vadd.f32 0.0, %v1020
      %v1022 = vpop.f32.mrb[0].mxu0
      %v1023 = vpop.f32.mrb[0].mxu0
      %v1024 = vadd.f32 0.0, %v1023
      %v1025 = vpop.f32.mrb[0].mxu0
      %1026 = vmatprep.mubr.bf16.mxu0 %v772
      %1027 = vmatmul.mubr.bf16.gmra.mrb[0].mxu0 %v593
      %v1028 = vpop.f32.mrb[0].mxu0
      %v1029 = vadd.f32 0.0, %v1028
      %v1030 = vpop.f32.mrb[0].mxu0
      %v1031 = vpop.f32.mrb[0].mxu0
      %v1032 = vadd.f32 0.0, %v1031
      %v1033 = vpop.f32.mrb[0].mxu0
      %1034 = vmatprep.mubr.bf16.mxu0 %v775
      %1035 = vmatmul.mubr.bf16.gmra.mrb[0].mxu0 %v595
      %v1036 = vpop.f32.mrb[0].mxu0
      %v1037 = vadd.f32 0.0, %v1036
      %v1038 = vpop.f32.mrb[0].mxu0
      %v1039 = vpop.f32.mrb[0].mxu0
      %v1040 = vadd.f32 0.0, %v1039
      %v1041 = vpop.f32.mrb[0].mxu0
      %1042 = vmatprep.mubr.bf16.mxu0 %v778
      %1043 = vmatmul.mubr.bf16.gmra.mrb[0].mxu0 %v597
      %v1044 = vpop.f32.mrb[0].mxu0
      %v1045 = vadd.f32 0.0, %v1044
      %v1046 = vpop.f32.mrb[0].mxu0
      %v1047 = vpop.f32.mrb[0].mxu0
      %v1048 = vadd.f32 0.0, %v1047
      %v1049 = vpop.f32.mrb[0].mxu0
      %1050 = vmatprep.mubr.bf16.mxu0 %v781
      %1051 = vmatmul.mubr.bf16.gmra.mrb[0].mxu0 %v599
      %v1052 = vpop.f32.mrb[0].mxu0
      %v1053 = vadd.f32 0.0, %v1052
      %v1054 = vpop.f32.mrb[0].mxu0
      %v1055 = vpop.f32.mrb[0].mxu0
      %v1056 = vadd.f32 0.0, %v1055
      %v1057 = vpop.f32.mrb[0].mxu0
      %1058 = vmatprep.mubr.bf16.mxu0 %v784
      %1059 = vmatmul.mubr.bf16.gmra.mrb[0].mxu0 %v601
      %v1060 = vpop.f32.mrb[0].mxu0
      %v1061 = vadd.f32 0.0, %v1060
      %v1062 = vpop.f32.mrb[0].mxu0
      %v1063 = vpop.f32.mrb[0].mxu0
      %v1064 = vadd.f32 0.0, %v1063
      %v1065 = vpop.f32.mrb[0].mxu0
      %1066 = vmatprep.mubr.bf16.mxu0 %v787
      %1067 = vmatmul.mubr.bf16.gmra.mrb[0].mxu0 %v603
      %v1068 = vpop.f32.mrb[0].mxu0
      %v1069 = vadd.f32 0.0, %v1068
      %v1070 = vpop.f32.mrb[0].mxu0
      %v1071 = vpop.f32.mrb[0].mxu0
      %v1072 = vadd.f32 0.0, %v1071
      %v1073 = vpop.f32.mrb[0].mxu0
      %1074 = vmatprep.mubr.bf16.mxu0 %v790
      %1075 = vmatmul.mubr.bf16.gmra.mrb[0].mxu0 %v605
      %v1076 = vpop.f32.mrb[0].mxu0
      %v1077 = vadd.f32 0.0, %v1076
      %v1078 = vpop.f32.mrb[0].mxu0
      %v1079 = vpop.f32.mrb[0].mxu0
      %v1080 = vadd.f32 0.0, %v1079
      %v1081 = vpop.f32.mrb[0].mxu0
      %1082 = vmatprep.mubr.bf16.mxu0 %v793
      %1083 = vmatmul.mubr.bf16.gmra.mrb[0].mxu0 %v607
      %v1084 = vpop.f32.mrb[0].mxu0
      %v1085 = vadd.f32 0.0, %v1084
      %v1086 = vpop.f32.mrb[0].mxu0
      %v1087 = vpop.f32.mrb[0].mxu0
      %v1088 = vadd.f32 0.0, %v1087
      %v1089 = vpop.f32.mrb[0].mxu0
      %1090 = vdwg.mxu0
      %v1091 = vld [vmem:[%s256] sm:$0x1]
      %v1093 = vlaneseq
      %v1094 = vshrl.u32 %v1093, 7
      %v1095 = vsub.s32 0, %v1094
      %v1096 = vrot.slane %v1091, %v1095
      %v1098 = vmul.f32 %v837, %v1096
      %v1099 = vmul.f32 %v840, %v1096
      %v1100 = vmul.f32 %v845, %v1096
      %v1101 = vmul.f32 %v848, %v1096
      %v1102 = vmul.f32 %v853, %v1096
      %v1103 = vmul.f32 %v856, %v1096
      %v1104 = vmul.f32 %v861, %v1096
      %v1105 = vmul.f32 %v864, %v1096
      %v1106 = vmul.f32 %v869, %v1096
      %v1107 = vmul.f32 %v872, %v1096
      %v1108 = vmul.f32 %v877, %v1096
      %v1109 = vmul.f32 %v880, %v1096
      %v1110 = vmul.f32 %v885, %v1096
      %v1111 = vmul.f32 %v888, %v1096
      %v1112 = vmul.f32 %v893, %v1096
      %v1113 = vmul.f32 %v896, %v1096
      %v1114 = vmul.f32 %v901, %v1096
      %v1115 = vmul.f32 %v904, %v1096
      %v1116 = vmul.f32 %v909, %v1096
      %v1117 = vmul.f32 %v912, %v1096
      %v1118 = vmul.f32 %v917, %v1096
      %v1119 = vmul.f32 %v920, %v1096
      %v1120 = vmul.f32 %v925, %v1096
      %v1121 = vmul.f32 %v928, %v1096
      %v1122 = vmul.f32 %v933, %v1096
      %v1123 = vmul.f32 %v936, %v1096
      %v1124 = vmul.f32 %v941, %v1096
      %v1125 = vmul.f32 %v944, %v1096
      %v1126 = vmul.f32 %v949, %v1096
      %v1127 = vmul.f32 %v952, %v1096
      %v1128 = vmul.f32 %v957, %v1096
      %v1129 = vmul.f32 %v960, %v1096
      %v1130 = vmul.f32 %v965, %v1096
      %v1131 = vmul.f32 %v968, %v1096
      %v1132 = vmul.f32 %v973, %v1096
      %v1133 = vmul.f32 %v976, %v1096
      %v1134 = vmul.f32 %v981, %v1096
      %v1135 = vmul.f32 %v984, %v1096
      %v1136 = vmul.f32 %v989, %v1096
      %v1137 = vmul.f32 %v992, %v1096
      %v1138 = vmul.f32 %v997, %v1096
      %v1139 = vmul.f32 %v1000, %v1096
      %v1140 = vmul.f32 %v1005, %v1096
      %v1141 = vmul.f32 %v1008, %v1096
      %v1142 = vmul.f32 %v1013, %v1096
      %v1143 = vmul.f32 %v1016, %v1096
      %v1144 = vmul.f32 %v1021, %v1096
      %v1145 = vmul.f32 %v1024, %v1096
      %v1146 = vmul.f32 %v1029, %v1096
      %v1147 = vmul.f32 %v1032, %v1096
      %v1148 = vmul.f32 %v1037, %v1096
      %v1149 = vmul.f32 %v1040, %v1096
      %v1150 = vmul.f32 %v1045, %v1096
      %v1151 = vmul.f32 %v1048, %v1096
      %v1152 = vmul.f32 %v1053, %v1096
      %v1153 = vmul.f32 %v1056, %v1096
      %v1154 = vmul.f32 %v1061, %v1096
      %v1155 = vmul.f32 %v1064, %v1096
      %v1156 = vmul.f32 %v1069, %v1096
      %v1157 = vmul.f32 %v1072, %v1096
      %v1158 = vmul.f32 %v1077, %v1096
      %v1159 = vmul.f32 %v1080, %v1096
      %v1160 = vmul.f32 %v1085, %v1096
      %v1161 = vmul.f32 %v1088, %v1096
      %v1162 = vld [vmem:[%s259] sm:$0x1]
      %v1164 = vlaneseq
      %v1165 = vshrl.u32 %v1164, 7
      %v1166 = vsub.s32 0, %v1165
      %v1167 = vrot.slane %v1162, %v1166
      %v1169 = vadd.f32 %v1098, %v1167
      %v1170 = vadd.f32 %v1099, %v1167
      %v1171 = vadd.f32 %v1100, %v1167
      %v1172 = vadd.f32 %v1101, %v1167
      %v1173 = vadd.f32 %v1102, %v1167
      %v1174 = vadd.f32 %v1103, %v1167
      %v1175 = vadd.f32 %v1104, %v1167
      %v1176 = vadd.f32 %v1105, %v1167
      %v1177 = vadd.f32 %v1106, %v1167
      %v1178 = vadd.f32 %v1107, %v1167
      %v1179 = vadd.f32 %v1108, %v1167
      %v1180 = vadd.f32 %v1109, %v1167
      %v1181 = vadd.f32 %v1110, %v1167
      %v1182 = vadd.f32 %v1111, %v1167
      %v1183 = vadd.f32 %v1112, %v1167
      %v1184 = vadd.f32 %v1113, %v1167
      %v1185 = vadd.f32 %v1114, %v1167
      %v1186 = vadd.f32 %v1115, %v1167
      %v1187 = vadd.f32 %v1116, %v1167
      %v1188 = vadd.f32 %v1117, %v1167
      %v1189 = vadd.f32 %v1118, %v1167
      %v1190 = vadd.f32 %v1119, %v1167
      %v1191 = vadd.f32 %v1120, %v1167
      %v1192 = vadd.f32 %v1121, %v1167
      %v1193 = vadd.f32 %v1122, %v1167
      %v1194 = vadd.f32 %v1123, %v1167
      %v1195 = vadd.f32 %v1124, %v1167
      %v1196 = vadd.f32 %v1125, %v1167
      %v1197 = vadd.f32 %v1126, %v1167
      %v1198 = vadd.f32 %v1127, %v1167
      %v1199 = vadd.f32 %v1128, %v1167
      %v1200 = vadd.f32 %v1129, %v1167
      %v1201 = vadd.f32 %v1130, %v1167
      %v1202 = vadd.f32 %v1131, %v1167
      %v1203 = vadd.f32 %v1132, %v1167
      %v1204 = vadd.f32 %v1133, %v1167
      %v1205 = vadd.f32 %v1134, %v1167
      %v1206 = vadd.f32 %v1135, %v1167
      %v1207 = vadd.f32 %v1136, %v1167
      %v1208 = vadd.f32 %v1137, %v1167
      %v1209 = vadd.f32 %v1138, %v1167
      %v1210 = vadd.f32 %v1139, %v1167
      %v1211 = vadd.f32 %v1140, %v1167
      %v1212 = vadd.f32 %v1141, %v1167
      %v1213 = vadd.f32 %v1142, %v1167
      %v1214 = vadd.f32 %v1143, %v1167
      %v1215 = vadd.f32 %v1144, %v1167
      %v1216 = vadd.f32 %v1145, %v1167
      %v1217 = vadd.f32 %v1146, %v1167
      %v1218 = vadd.f32 %v1147, %v1167
      %v1219 = vadd.f32 %v1148, %v1167
      %v1220 = vadd.f32 %v1149, %v1167
      %v1221 = vadd.f32 %v1150, %v1167
      %v1222 = vadd.f32 %v1151, %v1167
      %v1223 = vadd.f32 %v1152, %v1167
      %v1224 = vadd.f32 %v1153, %v1167
      %v1225 = vadd.f32 %v1154, %v1167
      %v1226 = vadd.f32 %v1155, %v1167
      %v1227 = vadd.f32 %v1156, %v1167
      %v1228 = vadd.f32 %v1157, %v1167
      %v1229 = vadd.f32 %v1158, %v1167
      %v1230 = vadd.f32 %v1159, %v1167
      %v1231 = vadd.f32 %v1160, %v1167
      %v1232 = vadd.f32 %v1161, %v1167
      %v1233 = vmax.f32 %v1169, 0.0
      %v1234 = vmax.f32 %v1170, 0.0
      %v1235 = vmax.f32 %v1171, 0.0
      %v1236 = vmax.f32 %v1172, 0.0
      %v1237 = vmax.f32 %v1173, 0.0
      %v1238 = vmax.f32 %v1174, 0.0
      %v1239 = vmax.f32 %v1175, 0.0
      %v1240 = vmax.f32 %v1176, 0.0
      %v1241 = vmax.f32 %v1177, 0.0
      %v1242 = vmax.f32 %v1178, 0.0
      %v1243 = vmax.f32 %v1179, 0.0
      %v1244 = vmax.f32 %v1180, 0.0
      %v1245 = vmax.f32 %v1181, 0.0
      %v1246 = vmax.f32 %v1182, 0.0
      %v1247 = vmax.f32 %v1183, 0.0
      %v1248 = vmax.f32 %v1184, 0.0
      %v1249 = vmax.f32 %v1185, 0.0
      %v1250 = vmax.f32 %v1186, 0.0
      %v1251 = vmax.f32 %v1187, 0.0
      %v1252 = vmax.f32 %v1188, 0.0
      %v1253 = vmax.f32 %v1189, 0.0
      %v1254 = vmax.f32 %v1190, 0.0
      %v1255 = vmax.f32 %v1191, 0.0
      %v1256 = vmax.f32 %v1192, 0.0
      %v1257 = vmax.f32 %v1193, 0.0
      %v1258 = vmax.f32 %v1194, 0.0
      %v1259 = vmax.f32 %v1195, 0.0
      %v1260 = vmax.f32 %v1196, 0.0
      %v1261 = vmax.f32 %v1197, 0.0
      %v1262 = vmax.f32 %v1198, 0.0
      %v1263 = vmax.f32 %v1199, 0.0
      %v1264 = vmax.f32 %v1200, 0.0
      %v1265 = vmax.f32 %v1201, 0.0
      %v1266 = vmax.f32 %v1202, 0.0
      %v1267 = vmax.f32 %v1203, 0.0
      %v1268 = vmax.f32 %v1204, 0.0
      %v1269 = vmax.f32 %v1205, 0.0
      %v1270 = vmax.f32 %v1206, 0.0
      %v1271 = vmax.f32 %v1207, 0.0
      %v1272 = vmax.f32 %v1208, 0.0
      %v1273 = vmax.f32 %v1209, 0.0
      %v1274 = vmax.f32 %v1210, 0.0
      %v1275 = vmax.f32 %v1211, 0.0
      %v1276 = vmax.f32 %v1212, 0.0
      %v1277 = vmax.f32 %v1213, 0.0
      %v1278 = vmax.f32 %v1214, 0.0
      %v1279 = vmax.f32 %v1215, 0.0
      %v1280 = vmax.f32 %v1216, 0.0
      %v1281 = vmax.f32 %v1217, 0.0
      %v1282 = vmax.f32 %v1218, 0.0
      %v1283 = vmax.f32 %v1219, 0.0
      %v1284 = vmax.f32 %v1220, 0.0
      %v1285 = vmax.f32 %v1221, 0.0
      %v1286 = vmax.f32 %v1222, 0.0
      %v1287 = vmax.f32 %v1223, 0.0
      %v1288 = vmax.f32 %v1224, 0.0
      %v1289 = vmax.f32 %v1225, 0.0
      %v1290 = vmax.f32 %v1226, 0.0
      %v1291 = vmax.f32 %v1227, 0.0
      %v1292 = vmax.f32 %v1228, 0.0
      %v1293 = vmax.f32 %v1229, 0.0
      %v1294 = vmax.f32 %v1230, 0.0
      %v1295 = vmax.f32 %v1231, 0.0
      %v1296 = vmax.f32 %v1232, 0.0
      %vm1297 = vcmask 523264
      %1298 = vst.msk [vmem:[%s267] sm:$0xff] %vm1297, %v1233
      %1299 = vst.msk [vmem:[%s267 + $0x8] sm:$0xff] %vm1297, %v1234
      %1300 = vst.msk [vmem:[%s267 + $0x10] sm:$0xff] %vm1297, %v1235
      %1301 = vst.msk [vmem:[%s267 + $0x18] sm:$0xff] %vm1297, %v1236
      %1302 = vst.msk [vmem:[%s267 + $0x20] sm:$0xff] %vm1297, %v1237
      %1303 = vst.msk [vmem:[%s267 + $0x28] sm:$0xff] %vm1297, %v1238
      %1304 = vst.msk [vmem:[%s267 + $0x30] sm:$0xff] %vm1297, %v1239
      %1305 = vst.msk [vmem:[%s267 + $0x38] sm:$0xff] %vm1297, %v1240
      %1306 = vst.msk [vmem:[%s267 + $0x40] sm:$0xff] %vm1297, %v1241
      %1307 = vst.msk [vmem:[%s267 + $0x48] sm:$0xff] %vm1297, %v1242
      %1308 = vst.msk [vmem:[%s267 + $0x50] sm:$0xff] %vm1297, %v1243
      %1309 = vst.msk [vmem:[%s267 + $0x58] sm:$0xff] %vm1297, %v1244
      %1310 = vst.msk [vmem:[%s267 + $0x60] sm:$0xff] %vm1297, %v1245
      %1311 = vst.msk [vmem:[%s267 + $0x68] sm:$0xff] %vm1297, %v1246
      %1312 = vst.msk [vmem:[%s267 + $0x70] sm:$0xff] %vm1297, %v1247
      %1313 = vst.msk [vmem:[%s267 + $0x78] sm:$0xff] %vm1297, %v1248
      %1314 = vst.msk [vmem:[%s267 + $0x80] sm:$0xff] %vm1297, %v1249
      %1315 = vst.msk [vmem:[%s267 + $0x88] sm:$0xff] %vm1297, %v1250
      %1316 = vst.msk [vmem:[%s267 + $0x90] sm:$0xff] %vm1297, %v1251
      %1317 = vst.msk [vmem:[%s267 + $0x98] sm:$0xff] %vm1297, %v1252
      %1318 = vst.msk [vmem:[%s267 + $0xa0] sm:$0xff] %vm1297, %v1253
      %1319 = vst.msk [vmem:[%s267 + $0xa8] sm:$0xff] %vm1297, %v1254
      %1320 = vst.msk [vmem:[%s267 + $0xb0] sm:$0xff] %vm1297, %v1255
      %1321 = vst.msk [vmem:[%s267 + $0xb8] sm:$0xff] %vm1297, %v1256
      %1322 = vst.msk [vmem:[%s267 + $0xc0] sm:$0xff] %vm1297, %v1257
      %1323 = vst.msk [vmem:[%s267 + $0xc8] sm:$0xff] %vm1297, %v1258
      %1324 = vst.msk [vmem:[%s267 + $0xd0] sm:$0xff] %vm1297, %v1259
      %1325 = vst.msk [vmem:[%s267 + $0xd8] sm:$0xff] %vm1297, %v1260
      %1326 = vst.msk [vmem:[%s267 + $0xe0] sm:$0xff] %vm1297, %v1261
      %1327 = vst.msk [vmem:[%s267 + $0xe8] sm:$0xff] %vm1297, %v1262
      %1328 = vst.msk [vmem:[%s267 + $0xf0] sm:$0xff] %vm1297, %v1263
      %1329 = vst.msk [vmem:[%s267 + $0xf8] sm:$0xff] %vm1297, %v1264
      %1330 = vst.msk [vmem:[%s267 + $0x100] sm:$0xff] %vm1297, %v1265
      %1331 = vst.msk [vmem:[%s267 + $0x108] sm:$0xff] %vm1297, %v1266
      %1332 = vst.msk [vmem:[%s267 + $0x110] sm:$0xff] %vm1297, %v1267
      %1333 = vst.msk [vmem:[%s267 + $0x118] sm:$0xff] %vm1297, %v1268
      %1334 = vst.msk [vmem:[%s267 + $0x120] sm:$0xff] %vm1297, %v1269
      %1335 = vst.msk [vmem:[%s267 + $0x128] sm:$0xff] %vm1297, %v1270
      %1336 = vst.msk [vmem:[%s267 + $0x130] sm:$0xff] %vm1297, %v1271
      %1337 = vst.msk [vmem:[%s267 + $0x138] sm:$0xff] %vm1297, %v1272
      %1338 = vst.msk [vmem:[%s267 + $0x140] sm:$0xff] %vm1297, %v1273
      %1339 = vst.msk [vmem:[%s267 + $0x148] sm:$0xff] %vm1297, %v1274
      %1340 = vst.msk [vmem:[%s267 + $0x150] sm:$0xff] %vm1297, %v1275
      %1341 = vst.msk [vmem:[%s267 + $0x158] sm:$0xff] %vm1297, %v1276
      %1342 = vst.msk [vmem:[%s267 + $0x160] sm:$0xff] %vm1297, %v1277
      %1343 = vst.msk [vmem:[%s267 + $0x168] sm:$0xff] %vm1297, %v1278
      %1344 = vst.msk [vmem:[%s267 + $0x170] sm:$0xff] %vm1297, %v1279
      %1345 = vst.msk [vmem:[%s267 + $0x178] sm:$0xff] %vm1297, %v1280
      %1346 = vst.msk [vmem:[%s267 + $0x180] sm:$0xff] %vm1297, %v1281
      %1347 = vst.msk [vmem:[%s267 + $0x188] sm:$0xff] %vm1297, %v1282
      %1348 = vst.msk [vmem:[%s267 + $0x190] sm:$0xff] %vm1297, %v1283
      %1349 = vst.msk [vmem:[%s267 + $0x198] sm:$0xff] %vm1297, %v1284
      %1350 = vst.msk [vmem:[%s267 + $0x1a0] sm:$0xff] %vm1297, %v1285
      %1351 = vst.msk [vmem:[%s267 + $0x1a8] sm:$0xff] %vm1297, %v1286
      %1352 = vst.msk [vmem:[%s267 + $0x1b0] sm:$0xff] %vm1297, %v1287
      %1353 = vst.msk [vmem:[%s267 + $0x1b8] sm:$0xff] %vm1297, %v1288
      %1354 = vst.msk [vmem:[%s267 + $0x1c0] sm:$0xff] %vm1297, %v1289
      %1355 = vst.msk [vmem:[%s267 + $0x1c8] sm:$0xff] %vm1297, %v1290
      %1356 = vst.msk [vmem:[%s267 + $0x1d0] sm:$0xff] %vm1297, %v1291
      %1357 = vst.msk [vmem:[%s267 + $0x1d8] sm:$0xff] %vm1297, %v1292
      %1358 = vst.msk [vmem:[%s267 + $0x1e0] sm:$0xff] %vm1297, %v1293
      %1359 = vst.msk [vmem:[%s267 + $0x1e8] sm:$0xff] %vm1297, %v1294
      %1360 = vst.msk [vmem:[%s267 + $0x1f0] sm:$0xff] %vm1297, %v1295
      %1361 = vst.msk [vmem:[%s267 + $0x1f8] sm:$0xff] %vm1297, %v1296
      %s1362 = smul.u32 64, %s19
      %p1363 = scmp.lt.s32.totalorder %s1362, 255
      %s1364 = scalar_select %p1363, %s1362, 255
      %p1365 = scmp.lt.s32.totalorder %s20, 0
      %s1366 = scalar_select %p1365, %s20, 0
      %s1367 = sadd.s32 %s1366, %s1364
      %s1368 = smul.addr %s1367, 8
      %s1369 = scalar_lea.vmem %s4, %s1368
      // Predicated region
      $region37: #{tpu_custom_call.1} parent=35 // pred_check
        %p1370 = pneg %p151
      $region38: #{tpu_custom_call.1} parent=35 // pred_check_branch
        %1372 = sbr.rel (%p1370) target = $region40
      $region39: #{tpu_custom_call.1} parent=35 // pred_region
        %s1373 = smul.u32 64, %s19
      $region40: #{tpu_custom_call.1} parent=35 // pred_fallthru
        _
    $region36: #{tpu_custom_call.1} parent=5 // pred_fallthru
      _
    %p1374 = scmp.le.s32.totalorder 2, %s10
    // Predicated region
    $region41: #{tpu_custom_call.1} parent=5 // pred_check
      %p1375 = pneg %p1374
    $region42: #{tpu_custom_call.1} parent=5 // pred_check_branch
      %1377 = sbr.rel (%p1375) target = $region44
    $region43: #{tpu_custom_call.1} parent=5 // pred_region
      %s1378 = ssub.s32 %s10, 2
      // Predicated region
      $region45: #{tpu_custom_call.1} parent=43 // pred_check
        %p1379 = pneg %p157
      $region46: #{tpu_custom_call.1} parent=43 // pred_check_branch
        %1381 = sbr.rel (%p1379) target = $region48
      $region47: #{tpu_custom_call.1} parent=43 // pred_region
        %s1382 = smul.u32 64, %s21
        %p1383 = scmp.lt.s32.totalorder %s1382, 255
        %s1384 = scalar_select %p1383, %s1382, 255
        %p1385 = scmp.lt.s32.totalorder %s22, 0
        %s1386 = scalar_select %p1385, %s22, 0
        %s1387 = sadd.s32 %s1386, %s1384
        %s1388 = smul.addr %s1387, 8
        %s1389 = scalar_lea.vmem %s4, %s1388
      $region48: #{tpu_custom_call.1} parent=43 // pred_fallthru
        _
    $region44: #{tpu_custom_call.1} parent=5 // pred_fallthru
      _
  $region6: #{tpu_custom_call.1} parent=0 // loop_footer
    %s14 = sadd.s32 1, %s10
  $region7: #{tpu_custom_call.1} parent=0 // loop_footer_branch
    %9 = sbr.rel target = $region3
  $region8: #{tpu_custom_call.1} parent=0 // loop_exit
    _

</llo_original>
